<compile_context>
chip_gen: v7x
topology: tpu7x:2x2x1
jax: 0.10.0
libtpu: 0.0.40
codegen_flags: <defaults>
</compile_context>

<pallas_src>
import functools

import jax
import jax.numpy as jnp
from jax.experimental import pallas as pl
from jax.experimental.pallas import tpu as pltpu


def _contrastive_loss_kernel(
    feat_hbm_ref,   # (2N, Dp) raw HBM ref (memory_space=pl.ANY); "a" rows DMA'd once
    k_ref,          # (Tk, Dp) current "b" key tile (auto-pipelined, double-buffered)
    o_ref,          # (1,)     SMEM scalar output
    q_stage_ref,    # (N, Dp)  VMEM staging buffer for the one-time q DMA (input dtype)
    q_sem,          # ()       DMA semaphore for the q copy
    h1n_ref,        # (N, Dp)  bf16 scratch: normalized h1 (resident MXU operand)
    l_ref,          # (N, 1)   f32 scratch: running row sum-exp
    acc_col_ref,    # (1, 1)   f32 scratch: column-lse accumulator
    acc_diag_ref,   # (1, 1)   f32 scratch: diagonal (positive-pair) accumulator
    *rest,          # (m_ref,) only in the online-max fallback path
    inv_t,
    n_q,
    block_k,
    use_fixed_shift,
):
    m_ref = None if use_fixed_shift else rest[0]
    k_idx = pl.program_id(0)
    nk = pl.num_programs(0)
    eps_sq = jnp.float32(1e-24)  # F.normalize eps=1e-12, applied to ||x||^2

    @pl.when(k_idx == 0)
    def _init():
        # One-time DMA of the "a" rows [0:N): the query block stays resident
        # for the whole key grid, so it is copied once, not double-buffered.
        cp = pltpu.make_async_copy(
            feat_hbm_ref.at[pl.ds(0, n_q), :], q_stage_ref, q_sem)
        cp.start()
        cp.wait()
        q = q_stage_ref[...].astype(jnp.float32)
        q = q * jax.lax.rsqrt(
            jnp.maximum(jnp.sum(q * q, axis=1, keepdims=True), eps_sq))
        h1n_ref[...] = q.astype(jnp.bfloat16)
        l_ref[...] = jnp.zeros(l_ref.shape, jnp.float32)
        acc_col_ref[...] = jnp.zeros(acc_col_ref.shape, jnp.float32)
        acc_diag_ref[...] = jnp.zeros(acc_diag_ref.shape, jnp.float32)
        if not use_fixed_shift:
            m_ref[...] = jnp.full(m_ref.shape, -jnp.inf, jnp.float32)

    # ---- normalize current key tile (f32) and fold in 1/temperature --------
    kt = k_ref[...].astype(jnp.float32)
    ktn = kt * jax.lax.rsqrt(
        jnp.maximum(jnp.sum(kt * kt, axis=1, keepdims=True), eps_sq))
    ktn = ktn * jnp.float32(inv_t)

    # ---- logits block (N, Tk): bf16 MXU operands, f32 accum, no transpose --
    s = jax.lax.dot_general(
        h1n_ref[...], ktn.astype(jnp.bfloat16),
        dimension_numbers=(((1,), (1,)), ((), ())),
        preferred_element_type=jnp.float32)

    if use_fixed_shift:
        # |s| <= 1/T (cosine similarities scaled by 1/T), so shifting by the
        # constant 1/T is a safe logsumexp stabilizer: one exp pass serves
        # both cross-entropy directions (row AND column sum-exp).
        p = jnp.exp(s - jnp.float32(inv_t))
        l_ref[...] += jnp.sum(p, axis=1, keepdims=True)
        acc_col_ref[...] += jnp.sum(
            jnp.log(jnp.sum(p, axis=0, keepdims=True)))
    else:
        # Fallback for very small temperatures: online row logsumexp plus
        # exact per-tile column logsumexp (full query dim is resident).
        m_prev = m_ref[...]
        m_new = jnp.maximum(m_prev, jnp.max(s, axis=1, keepdims=True))
        alpha = jnp.exp(m_prev - m_new)
        l_ref[...] = alpha * l_ref[...] + jnp.sum(
            jnp.exp(s - m_new), axis=1, keepdims=True)
        m_ref[...] = m_new
        m_col = jnp.max(s, axis=0, keepdims=True)                   # (1, Tk)
        acc_col_ref[...] += jnp.sum(
            m_col + jnp.log(jnp.sum(jnp.exp(s - m_col), axis=0, keepdims=True)))

    # ---- diagonal (positive-pair) logits for this key tile ------------------
    # Sliced from the resident bf16 normalized queries (no extra HBM stream),
    # so the subtracted diagonal matches the bf16 operand that produced `s`;
    # ktn already carries the 1/T factor.
    q_start = pl.multiple_of(k_idx * block_k, block_k)
    h1_tile = h1n_ref[pl.ds(q_start, block_k), :].astype(jnp.float32)
    acc_diag_ref[...] += jnp.sum(h1_tile * ktn)

    # ---- finalize on the last key tile --------------------------------------
    # NOTE: o_ref has a constant output index map, so the value written on the
    # last key step is what Pallas writes back (revisited-output semantics).
    # Do not add a parallel query axis without restructuring this output.
    @pl.when(k_idx == nk - 1)
    def _finalize():
        if use_fixed_shift:
            shift_total = jnp.float32(n_q * inv_t)
            row_lse_sum = shift_total + jnp.sum(jnp.log(l_ref[...]))
            col_lse_sum = shift_total + jnp.sum(acc_col_ref[...])
        else:
            row_lse_sum = jnp.sum(m_ref[...] + jnp.log(l_ref[...]))
            col_lse_sum = jnp.sum(acc_col_ref[...])
        o_ref[0] = (row_lse_sum + col_lse_sum
                    - 2.0 * jnp.sum(acc_diag_ref[...]))


def contrastive_loss(features, temperature, *, block_k=None):
    """features: (2N, D) float array (f32 or bf16). Returns scalar f32 loss."""
    two_n, d = features.shape
    if two_n % 2 != 0:
        raise ValueError("features.shape[0] must be even (two stacked views)")
    n = two_n // 2
    if n % 8 != 0:
        # TODO(synk): ragged N would need key padding + -inf masking.
        raise ValueError("N = features.shape[0] // 2 must be a multiple of 8")

    # Pad the feature dim to a multiple of 128 lanes; zero columns change
    # neither the norms nor the dot products.
    d_pad = ((d + 127) // 128) * 128
    if d_pad != d:
        features = jnp.pad(features, ((0, 0), (0, d_pad - d)))
    itemsize = jnp.dtype(features.dtype).itemsize

    # Key-tile size capped at 256: fills the 256-wide MXU on v6e/v7x without
    # doubling the key double-buffers / (N, Tk) f32 temporaries, and is also
    # right-sized for v5e's 128-wide MXU. Small tails are for tiny batches.
    if block_k is None:
        block_k = next(c for c in (256, 128, 64, 32, 16, 8) if n % c == 0)
    nk = n // block_k

    # Bounded-logit fixed shift is safe because |logit| <= 1/T; keep the
    # online-max fallback for pathologically small temperatures.
    use_fixed_shift = float(temperature) >= 0.03

    # NOTE: temperature is a compile-time constant (module hyperparameter);
    # pass it as an SMEM scalar instead if it varies at runtime.
    kernel = functools.partial(
        _contrastive_loss_kernel,
        inv_t=float(1.0 / temperature),
        n_q=n,
        block_k=block_k,
        use_fixed_shift=use_fixed_shift,
    )

    scratch_shapes = [
        pltpu.VMEM((n, d_pad), features.dtype),   # q staging (single copy)
        pltpu.SemaphoreType.DMA(()),              # q DMA semaphore
        pltpu.VMEM((n, d_pad), jnp.bfloat16),     # normalized h1 (bf16)
        pltpu.VMEM((n, 1), jnp.float32),          # running row sum-exp
        pltpu.VMEM((1, 1), jnp.float32),          # column-lse accumulator
        pltpu.VMEM((1, 1), jnp.float32),          # diagonal accumulator
    ]
    if not use_fixed_shift:
        scratch_shapes.append(pltpu.VMEM((n, 1), jnp.float32))  # running row max

    # VMEM budget: derive from the actual footprint and the chip capacity
    # (~48 MiB cap on v7x's 64 MiB, up to ~96 MiB on v6e/v5e's 128 MiB).
    est_vmem = (
        n * d_pad * itemsize            # q staging (single-buffered)
        + n * d_pad * 2                 # bf16 normalized h1
        + 2 * block_k * d_pad * itemsize  # double-buffered key tiles
        + 2 * n * 512                   # (N,1) f32 row stats, lane-padded
        + 4 * n * block_k * 4           # (N,Tk) f32 logits/exp temporaries
    )
    try:
        info = pltpu.get_tpu_info()
        vmem_cap = int(getattr(info, "vmem_capacity_bytes", 64 * 1024 * 1024))
    except Exception:  # pragma: no cover - conservative fallback
        vmem_cap = 64 * 1024 * 1024
    vmem_limit = int(max(32 * 1024 * 1024,
                         min(2 * est_vmem, int(0.75 * vmem_cap))))

    grid_spec = pltpu.PrefetchScalarGridSpec(
        num_scalar_prefetch=0,
        grid=(nk,),
        in_specs=[
            # whole features array, left in HBM; "a" rows DMA'd once in-kernel
            pl.BlockSpec(memory_space=pl.ANY),
            # h2 key tile k  (rows N + k*Tk : N + (k+1)*Tk)
            pl.BlockSpec((block_k, d_pad), lambda k: (nk + k, 0)),
        ],
        out_specs=pl.BlockSpec((1,), lambda k: (0,),
                               memory_space=pltpu.MemorySpace.SMEM),
        scratch_shapes=scratch_shapes,
    )

    out = pl.pallas_call(
        kernel,
        out_shape=jax.ShapeDtypeStruct((1,), jnp.float32),
        grid_spec=grid_spec,
        compiler_params=pltpu.CompilerParams(
            dimension_semantics=("arbitrary",),   # key axis is a reduction
            vmem_limit_bytes=vmem_limit,
        ),
        cost_estimate=pl.CostEstimate(
            flops=2 * n * n * d_pad,
            transcendentals=n * n,
            bytes_accessed=2 * n * d_pad * itemsize + 4,
        ),
    )(features, features)
    return out[0]


def _reference_loss(features, temperature):
    """Pure-JAX f32 reference for the same (intended) semantics."""
    f = features.astype(jnp.float32)
    n = f.shape[0] // 2
    f = f / jnp.maximum(jnp.linalg.norm(f, axis=1, keepdims=True), 1e-12)
    h1, h2 = f[:n], f[n:]
    logits_ab = (h1 @ h2.T) / temperature
    logits_ba = (h2 @ h1.T) / temperature
    idx = jnp.arange(n)

    def ce_sum(logits):
        logp = jax.nn.log_softmax(logits, axis=1)
        return -jnp.sum(logp[idx, idx])

    return ce_sum(logits_ab) + ce_sum(logits_ba)


if __name__ == "__main__":
    key = jax.random.PRNGKey(0)
    N, D = 8, 32                       # 2N = 16 samples, feature dim 32
    temperature = 0.5                  # module hyperparameter (deterministic)
    features = jax.random.normal(key, (2 * N, D), dtype=jnp.float32)

    loss = jax.block_until_ready(contrastive_loss(features, temperature))
    ref = jax.block_until_ready(_reference_loss(features, temperature))

    assert jnp.isfinite(loss), "kernel produced non-finite loss"
    # bf16 MXU operands -> tolerance loosened vs the pure-f32 reference
    assert jnp.allclose(loss, ref, rtol=2e-2, atol=2e-2), (loss, ref)
    print("KERNEL_OK")
</pallas_src>

<mosaic_0001>
module attributes {stable_mosaic.version = 11 : i64} {
  func.func @_contrastive_loss_kernel(%arg0: i32, %arg1: memref<16x128xf32, #tpu.memory_space<any>>, %arg2: memref<8x128xf32, #tpu.memory_space<vmem>>, %arg3: memref<1xf32, #tpu.memory_space<smem>>, %arg4: memref<8x128xf32, #tpu.memory_space<vmem>>, %arg5: memref<!tpu.dma_semaphore, #tpu.memory_space<semaphore_mem>>, %arg6: memref<8x128xbf16, #tpu.memory_space<vmem>>, %arg7: memref<8x1xf32, #tpu.memory_space<vmem>>, %arg8: memref<1x1xf32, #tpu.memory_space<vmem>>, %arg9: memref<1x1xf32, #tpu.memory_space<vmem>>) attributes {dimension_semantics = [#tpu.dimension_semantics<arbitrary>], iteration_bounds = array<i64: 1>, scalar_prefetch = 0 : i64, scratch_operands = 6 : i64, tpu.core_type = #tpu.core_type<tc>, window_params = [{}, {transform_indices = @transform_1, window_bounds = array<i64: 8, 128>}, {transform_indices = @transform_2, window_bounds = array<i64: 1>}]} {
    %c0_i32 = arith.constant 0 : i32
    %0 = arith.cmpi eq, %arg0, %c0_i32 : i32
    %1 = arith.extui %0 : i1 to i32
    %cst = arith.constant 1.000000e-24 : f32
    %c0_i32_0 = arith.constant 0 : i32
    %2 = arith.cmpi ne, %1, %c0_i32_0 : i32
    scf.if %2 {
      %c0_i32_28 = arith.constant 0 : i32
      %c0_i32_29 = arith.constant 0 : i32
      %53 = tpu.memref_slice %arg1[%c0_i32_28, %c0_i32_29] : memref<16x128xf32, #tpu.memory_space<any>> -> memref<8x128xf32, #tpu.memory_space<any>>
      tpu.enqueue_dma source(%53 : memref<8x128xf32, #tpu.memory_space<any>>) target(%arg4 : memref<8x128xf32, #tpu.memory_space<vmem>>) target_semaphore(%arg5 : memref<!tpu.dma_semaphore, #tpu.memory_space<semaphore_mem>>)
      %c0_i32_30 = arith.constant 0 : i32
      %c0_i32_31 = arith.constant 0 : i32
      %54 = tpu.memref_slice %arg1[%c0_i32_30, %c0_i32_31] : memref<16x128xf32, #tpu.memory_space<any>> -> memref<8x128xf32, #tpu.memory_space<any>>
      tpu.wait_dma2 semaphore(%arg5 : memref<!tpu.dma_semaphore, #tpu.memory_space<semaphore_mem>>) src(%54 : memref<8x128xf32, #tpu.memory_space<any>>) dst(%arg4 : memref<8x128xf32, #tpu.memory_space<vmem>>)
      %c0_32 = arith.constant 0 : index
      %c0_33 = arith.constant 0 : index
      %55 = vector.load %arg4[%c0_32, %c0_33] : memref<8x128xf32, #tpu.memory_space<vmem>>, vector<8x128xf32>
      %56 = arith.mulf %55, %55 : vector<8x128xf32>
      %cst_34 = arith.constant dense<0.000000e+00> : vector<8xf32>
      %57 = vector.multi_reduction <add>, %56, %cst_34 [1] : vector<8x128xf32> to vector<8xf32>
      %58 = vector.shape_cast %57 : vector<8xf32> to vector<8x1xf32>
      %59 = vector.broadcast %cst : f32 to vector<8x1xf32>
      %60 = arith.maximumf %58, %59 : vector<8x1xf32>
      %61 = math.rsqrt %60 : vector<8x1xf32>
      %62 = vector.broadcast %61 : vector<8x1xf32> to vector<8x128xf32>
      %63 = arith.mulf %55, %62 : vector<8x128xf32>
      %64 = arith.truncf %63 : vector<8x128xf32> to vector<8x128xbf16>
      %c0_35 = arith.constant 0 : index
      %c0_36 = arith.constant 0 : index
      %65 = vector.load %arg6[%c0_35, %c0_36] : memref<8x128xbf16, #tpu.memory_space<vmem>>, vector<8x128xbf16>
      tpu.vector_store %arg6[%c0_35, %c0_36], %64 {strides = array<i32>} : memref<8x128xbf16, #tpu.memory_space<vmem>>, vector<8x128xbf16>,
      %cst_37 = arith.constant 0.000000e+00 : f32
      %66 = vector.broadcast %cst_37 : f32 to vector<8x1xf32>
      %c0_38 = arith.constant 0 : index
      %c0_39 = arith.constant 0 : index
      %67 = vector.load %arg7[%c0_38, %c0_39] : memref<8x1xf32, #tpu.memory_space<vmem>>, vector<8x1xf32>
      tpu.vector_store %arg7[%c0_38, %c0_39], %66 {strides = array<i32>} : memref<8x1xf32, #tpu.memory_space<vmem>>, vector<8x1xf32>,
      %cst_40 = arith.constant 0.000000e+00 : f32
      %68 = vector.broadcast %cst_40 : f32 to vector<1x1xf32>
      %c0_41 = arith.constant 0 : index
      %c0_42 = arith.constant 0 : index
      %69 = vector.load %arg8[%c0_41, %c0_42] : memref<1x1xf32, #tpu.memory_space<vmem>>, vector<1x1xf32>
      tpu.vector_store %arg8[%c0_41, %c0_42], %68 {strides = array<i32>} : memref<1x1xf32, #tpu.memory_space<vmem>>, vector<1x1xf32>,
      %cst_43 = arith.constant 0.000000e+00 : f32
      %70 = vector.broadcast %cst_43 : f32 to vector<1x1xf32>
      %c0_44 = arith.constant 0 : index
      %c0_45 = arith.constant 0 : index
      %71 = vector.load %arg9[%c0_44, %c0_45] : memref<1x1xf32, #tpu.memory_space<vmem>>, vector<1x1xf32>
      tpu.vector_store %arg9[%c0_44, %c0_45], %70 {strides = array<i32>} : memref<1x1xf32, #tpu.memory_space<vmem>>, vector<1x1xf32>,
    } else {
    }
    %c0 = arith.constant 0 : index
    %c0_1 = arith.constant 0 : index
    %3 = vector.load %arg2[%c0, %c0_1] : memref<8x128xf32, #tpu.memory_space<vmem>>, vector<8x128xf32>
    %4 = arith.mulf %3, %3 : vector<8x128xf32>
    %cst_2 = arith.constant dense<0.000000e+00> : vector<8xf32>
    %5 = vector.multi_reduction <add>, %4, %cst_2 [1] : vector<8x128xf32> to vector<8xf32>
    %6 = vector.shape_cast %5 : vector<8xf32> to vector<8x1xf32>
    %cst_3 = arith.constant 1.000000e-24 : f32
    %7 = vector.broadcast %cst_3 : f32 to vector<8x1xf32>
    %8 = arith.maximumf %6, %7 : vector<8x1xf32>
    %9 = math.rsqrt %8 : vector<8x1xf32>
    %10 = vector.broadcast %9 : vector<8x1xf32> to vector<8x128xf32>
    %11 = arith.mulf %3, %10 : vector<8x128xf32>
    %cst_4 = arith.constant 2.000000e+00 : f32
    %12 = vector.broadcast %cst_4 : f32 to vector<8x128xf32>
    %13 = arith.mulf %11, %12 : vector<8x128xf32>
    %c0_5 = arith.constant 0 : index
    %c0_6 = arith.constant 0 : index
    %14 = vector.load %arg6[%c0_5, %c0_6] : memref<8x128xbf16, #tpu.memory_space<vmem>>, vector<8x128xbf16>
    %15 = arith.truncf %13 : vector<8x128xf32> to vector<8x128xbf16>
    %cst_7 = arith.constant dense<0.000000e+00> : vector<8x8xf32>
    %16 = tpu.matmul %14, %15, %cst_7 {dimension_numbers = #tpu.dot_dimension_numbers<[1], [1], [0], [0], [0, 0, 1, 0], [], []>} : vector<8x128xbf16>, vector<8x128xbf16>, vector<8x8xf32> -> vector<8x8xf32>
    %cst_8 = arith.constant 2.000000e+00 : f32
    %17 = vector.broadcast %cst_8 : f32 to vector<8x8xf32>
    %18 = arith.subf %16, %17 : vector<8x8xf32>
    %19 = math.exp %18 : vector<8x8xf32>
    %c0_9 = arith.constant 0 : index
    %c0_10 = arith.constant 0 : index
    %20 = vector.load %arg7[%c0_9, %c0_10] : memref<8x1xf32, #tpu.memory_space<vmem>>, vector<8x1xf32>
    %cst_11 = arith.constant dense<0.000000e+00> : vector<8xf32>
    %21 = vector.multi_reduction <add>, %19, %cst_11 [1] : vector<8x8xf32> to vector<8xf32>
    %22 = vector.shape_cast %21 : vector<8xf32> to vector<8x1xf32>
    %23 = arith.addf %20, %22 : vector<8x1xf32>
    %c0_12 = arith.constant 0 : index
    %c0_13 = arith.constant 0 : index
    %24 = vector.load %arg7[%c0_12, %c0_13] : memref<8x1xf32, #tpu.memory_space<vmem>>, vector<8x1xf32>
    tpu.vector_store %arg7[%c0_12, %c0_13], %23 {strides = array<i32>} : memref<8x1xf32, #tpu.memory_space<vmem>>, vector<8x1xf32>,
    %c0_14 = arith.constant 0 : index
    %c0_15 = arith.constant 0 : index
    %25 = vector.load %arg8[%c0_14, %c0_15] : memref<1x1xf32, #tpu.memory_space<vmem>>, vector<1x1xf32>
    %cst_16 = arith.constant dense<0.000000e+00> : vector<8xf32>
    %26 = vector.multi_reduction <add>, %19, %cst_16 [0] : vector<8x8xf32> to vector<8xf32>
    %27 = vector.shape_cast %26 : vector<8xf32> to vector<1x8xf32>
    %28 = math.log %27 : vector<1x8xf32>
    %29 = vector.shape_cast %28 : vector<1x8xf32> to vector<1x1x8xf32>
    %cst_17 = arith.constant dense<0.000000e+00> : vector<1xf32>
    %30 = vector.multi_reduction <add>, %29, %cst_17 [1, 2] : vector<1x1x8xf32> to vector<1xf32>
    %31 = vector.shape_cast %30 : vector<1xf32> to vector<1x1x1xf32>
    %32 = vector.extract %31[0, 0, 0] : f32 from vector<1x1x1xf32>
    %33 = vector.broadcast %32 : f32 to vector<1x1xf32>
    %34 = arith.addf %25, %33 : vector<1x1xf32>
    %c0_18 = arith.constant 0 : index
    %c0_19 = arith.constant 0 : index
    %35 = vector.load %arg8[%c0_18, %c0_19] : memref<1x1xf32, #tpu.memory_space<vmem>>, vector<1x1xf32>
    tpu.vector_store %arg8[%c0_18, %c0_19], %34 {strides = array<i32>} : memref<1x1xf32, #tpu.memory_space<vmem>>, vector<1x1xf32>,
    %c8_i32 = arith.constant 8 : i32
    %36 = arith.muli %arg0, %c8_i32 : i32
    %37 = tpu.assume_multiple %36, 8 : i32
    %38 = arith.index_cast %37 : i32 to index
    %c0_20 = arith.constant 0 : index
    %39 = vector.load %arg6[%38, %c0_20] : memref<8x128xbf16, #tpu.memory_space<vmem>>, vector<8x128xbf16>
    %40 = arith.extf %39 : vector<8x128xbf16> to vector<8x128xf32>
    %c0_21 = arith.constant 0 : index
    %c0_22 = arith.constant 0 : index
    %41 = vector.load %arg9[%c0_21, %c0_22] : memref<1x1xf32, #tpu.memory_space<vmem>>, vector<1x1xf32>
    %42 = arith.mulf %40, %13 : vector<8x128xf32>
    %43 = vector.shape_cast %42 : vector<8x128xf32> to vector<1x8x128xf32>
    %cst_23 = arith.constant dense<0.000000e+00> : vector<1xf32>
    %44 = vector.multi_reduction <add>, %43, %cst_23 [1, 2] : vector<1x8x128xf32> to vector<1xf32>
    %45 = vector.shape_cast %44 : vector<1xf32> to vector<1x1x1xf32>
    %46 = vector.extract %45[0, 0, 0] : f32 from vector<1x1x1xf32>
    %47 = vector.broadcast %46 : f32 to vector<1x1xf32>
    %48 = arith.addf %41, %47 : vector<1x1xf32>
    %c0_24 = arith.constant 0 : index
    %c0_25 = arith.constant 0 : index
    %49 = vector.load %arg9[%c0_24, %c0_25] : memref<1x1xf32, #tpu.memory_space<vmem>>, vector<1x1xf32>
    tpu.vector_store %arg9[%c0_24, %c0_25], %48 {strides = array<i32>} : memref<1x1xf32, #tpu.memory_space<vmem>>, vector<1x1xf32>,
    %c0_i32_26 = arith.constant 0 : i32
    %50 = arith.cmpi eq, %arg0, %c0_i32_26 : i32
    %51 = arith.extui %50 : i1 to i32
    %c0_i32_27 = arith.constant 0 : i32
    %52 = arith.cmpi ne, %51, %c0_i32_27 : i32
    scf.if %52 {
      %c0_28 = arith.constant 0 : index
      %c0_29 = arith.constant 0 : index
      %53 = vector.load %arg7[%c0_28, %c0_29] : memref<8x1xf32, #tpu.memory_space<vmem>>, vector<8x1xf32>
      %54 = math.log %53 : vector<8x1xf32>
      %55 = vector.shape_cast %54 : vector<8x1xf32> to vector<1x8x1xf32>
      %cst_30 = arith.constant dense<0.000000e+00> : vector<1xf32>
      %56 = vector.multi_reduction <add>, %55, %cst_30 [1, 2] : vector<1x8x1xf32> to vector<1xf32>
      %57 = vector.shape_cast %56 : vector<1xf32> to vector<1x1x1xf32>
      %58 = vector.extract %57[0, 0, 0] : f32 from vector<1x1x1xf32>
      %cst_31 = arith.constant 1.600000e+01 : f32
      %59 = arith.addf %cst_31, %58 : f32
      %c0_32 = arith.constant 0 : index
      %c0_33 = arith.constant 0 : index
      %60 = vector.load %arg8[%c0_32, %c0_33] : memref<1x1xf32, #tpu.memory_space<vmem>>, vector<1x1xf32>
      %61 = vector.shape_cast %60 : vector<1x1xf32> to vector<1x1x1xf32>
      %cst_34 = arith.constant dense<0.000000e+00> : vector<1xf32>
      %62 = vector.multi_reduction <add>, %61, %cst_34 [1, 2] : vector<1x1x1xf32> to vector<1xf32>
      %63 = vector.shape_cast %62 : vector<1xf32> to vector<1x1x1xf32>
      %64 = vector.extract %63[0, 0, 0] : f32 from vector<1x1x1xf32>
      %cst_35 = arith.constant 1.600000e+01 : f32
      %65 = arith.addf %cst_35, %64 : f32
      %66 = arith.addf %59, %65 : f32
      %c0_36 = arith.constant 0 : index
      %c0_37 = arith.constant 0 : index
      %67 = vector.load %arg9[%c0_36, %c0_37] : memref<1x1xf32, #tpu.memory_space<vmem>>, vector<1x1xf32>
      %68 = vector.shape_cast %67 : vector<1x1xf32> to vector<1x1x1xf32>
      %cst_38 = arith.constant dense<0.000000e+00> : vector<1xf32>
      %69 = vector.multi_reduction <add>, %68, %cst_38 [1, 2] : vector<1x1x1xf32> to vector<1xf32>
      %70 = vector.shape_cast %69 : vector<1xf32> to vector<1x1x1xf32>
      %71 = vector.extract %70[0, 0, 0] : f32 from vector<1x1x1xf32>
      %cst_39 = arith.constant 2.000000e+00 : f32
      %72 = arith.mulf %cst_39, %71 : f32
      %73 = arith.subf %66, %72 : f32
      %c0_40 = arith.constant 0 : index
      %74 = memref.load %arg3[%c0_40] : memref<1xf32, #tpu.memory_space<smem>>
      memref.store %73, %arg3[%c0_40] : memref<1xf32, #tpu.memory_space<smem>>
    } else {
    }
    return
  }
  func.func @transform_1(%arg0: i32) -> (i32, i32) {
    %c1_i32 = arith.constant 1 : i32
    %0 = arith.addi %c1_i32, %arg0 : i32
    %c0_i32 = arith.constant 0 : i32
    %c0_i32_0 = arith.constant 0 : i32
    return %0, %c0_i32 : i32, i32
  }
  func.func @transform_2(%arg0: i32) -> i32 {
    %c0_i32 = arith.constant 0 : i32
    %c0_i32_0 = arith.constant 0 : i32
    return %c0_i32 : i32
  }
}

</mosaic_0001>

<llo_original>
// kernel: tpu_custom_call.1
$region0: #{tpu_custom_call.1}
  #allocation0 [shape = 'u32[]', space=smem, size = 0x4, offset = 0x4, fixed_abs, tag = 'smem constant byte address 0x4 - core index']
  #allocation1 [shape = 'u32[144,128]{1,0:T(1,128)}', space=vmem, size = 0x12000, scoped, tag = 'internal scratch']
  #allocation2 [shape = 'f32[8,128]{1,0:T(8,128)}', space=vmem, size = 0x1000, scoped, tag = 'scratch operand']
  #allocation3 [shape = 's32[1]{0}', space=sflag, size = 0x4, scoped, tag = 'scratch operand']
  #allocation4 [shape = 'bf16[8,128]{1,0:T(8,128)(2,1)}', space=vmem, size = 0x800, scoped, tag = 'scratch operand']
  #allocation5 [shape = 'f32[8,1]{1,0:T(8,128)}', space=vmem, size = 0x1000, scoped, tag = 'scratch operand']
  #allocation6 [shape = 'f32[1,1]{1,0:T(1,128)}', space=vmem, size = 0x200, scoped, tag = 'scratch operand']
  #allocation7 [shape = 'f32[1,1]{1,0:T(1,128)}', space=vmem, size = 0x200, scoped, tag = 'scratch operand']
  #allocation12 [shape = 's32[]', space=sflag, size = 0x4, offset = 0, fixed_abs, tag = 'sflag constant byte address 0x0 - dummy sync flag']
  #allocation13 [shape = 's32[]', space=sflag, size = 0x4, offset = 0, fixed_abs, tag = 'sflag constant byte address 0x0 - dummy sync flag']
  #allocation14 [shape = 'u32[]', space=smem, size = 0x4, offset = 0x44, fixed_abs, tag = 'smem constant byte address 0x44 - assertion arg 0']
  #allocation15 [shape = 'u32[]', space=smem, size = 0x4, offset = 0x48, fixed_abs, tag = 'smem constant byte address 0x48 - assertion arg 1']
  %s0 = inlined_call_operand.hbm [shape: f32[16,128], index: 0, kind: input, shape index: {}]
  %s1 = inlined_call_operand.hbm [shape: f32[16,128], index: 1, kind: input, shape index: {}]
  %s2 = inlined_call_operand.hbm [shape: f32[1], index: 2, kind: output, shape index: {}]
  %s3 = sld [smem:[#allocation0]]
  $region30: #{tpu_custom_call.1} parent=0
    _
  %s5 = ssub.s32 1, %s3
  %s6 = scalar_select 0, %s5, %s3
  $region1: #{tpu_custom_call.1} parent=0
    #allocation8 [shape = 'u8[4096]{0}', space=vmem, size = 0x1000, scoped, tag = 'input window, operand 1, single buffered']
    #allocation9 [shape = 's32[1]{0}', space=sflag, size = 0x4, scoped, tag = 'scoped memory for tpu_custom_call.1']
    #allocation10 [shape = 's32[1]{0}', space=sflag, size = 0x4, scoped, tag = 'scoped memory for tpu_custom_call.1']
    #allocation11 [shape = 'u8[512]{0}', space=smem, size = 0x200, scoped, tag = 'output window, operand 0, single buffered']
    %7 = vsyncpa [#allocation9], 0
    %8 = vsyncpa [#allocation10], 0
    // Predicated region
    $region2: #{tpu_custom_call.1} parent=1 // pred_check
      _
    $region3: #{tpu_custom_call.1} parent=1 // pred_check_branch
      %10 = sbr.rel (0) target = $region5
    $region4: #{tpu_custom_call.1} parent=1 // pred_region
      %s11 = sadd.s32 0, 1
      %s13 = ssub.s32 128, 128
      %14 = vsyncadd [#allocation9], %s13
      %s15 = smul.addr %s11, 128
      %s16 = scalar_lea.hbm %s1, %s15
      %s18 = sshll.u32 [#allocation8], 4
      %s19 = int_to_ptr.vmem [resolvable:$true] %s18
      %21 = dma.hbm_to_vmem [thread:$0]  %s16, 128, %s19, [#allocation9]
    $region5: #{tpu_custom_call.1} parent=1 // pred_fallthru
      _
    // Predicated region
    $region6: #{tpu_custom_call.1} parent=1 // pred_check
      _
    $region7: #{tpu_custom_call.1} parent=1 // pred_check_branch
      %23 = sbr.rel (0) target = $region9
    $region8: #{tpu_custom_call.1} parent=1 // pred_region
      %24 = dma.done [#allocation9], 128
    $region9: #{tpu_custom_call.1} parent=1 // pred_fallthru
      _
    %s25 = sadd.s32 0, 1
    %p27 = scmp.eq.s32.totalorder 0, 0
    // Predicated region
    $region10: #{tpu_custom_call.1} parent=1 // pred_check
      %p28 = pneg %p27
    $region11: #{tpu_custom_call.1} parent=1 // pred_check_branch
      %30 = sbr.rel (%p28) target = $region13
    $region12: #{tpu_custom_call.1} parent=1 // pred_region
      // Predicated region
      $region14: #{tpu_custom_call.1} parent=12 // pred_check
        _
      $region15: #{tpu_custom_call.1} parent=12 // pred_check_branch
        %32 = sbr.rel target = $region17
      $region16: #{tpu_custom_call.1} parent=12 // pred_region
        %33 = sst [smem:[#allocation14]] [#allocation13]
        %34 = sst [smem:[#allocation15]] [#allocation12]
      $region17: #{tpu_custom_call.1} parent=12 // pred_fallthru
        _
      %36 = shalt.err (0)
      %s38 = sshll.u32 [#allocation2], 4
      %s39 = int_to_ptr.vmem [resolvable:$true] %s38
      %41 = dma.hbm_to_vmem [thread:$0]  %s0, 128, %s39, [#allocation3]
      %s42 = smul.u32 8, 1
      %s43 = sshll.u32 %s42, 4
      %44 = dma.done [#allocation3], %s43
      %v45 = vld [vmem:[#allocation2] sm:$0xff]
      %v46 = vmul.f32 %v45, %v45
      %47 = vadd.xlane.f32.xlu0 %v46
      %v48 = vpop.xlane.xlu0 %47
      %v49 = vmax.f32 %v48, 1e-24
      %v50 = vrsqrt.pop %v49
      %v51 = vmul.f32 %v45, %v50
      %v52 = vpack.c.bf16 %v51, %v51
      %53 = vst [vmem:[#allocation4] sm:$0xf] %v52
      %vm54 = vcmask 7168
      %55 = vst.msk [vmem:[#allocation5] sm:$0xff] %vm54, 0.0
      %vm56 = vcmask 0
      %57 = vst.msk [vmem:[#allocation6] sm:$0x1] %vm56, 0.0
      %58 = vst.msk [vmem:[#allocation7] sm:$0x1] %vm56, 0.0
    $region13: #{tpu_custom_call.1} parent=1 // pred_fallthru
      _
    %v59 = vld [vmem:[#allocation8] sm:$0xff]
    %v60 = vmul.f32 %v59, %v59
    %61 = vadd.xlane.f32.xlu0 %v60
    %v62 = vpop.xlane.xlu0 %61
    %v63 = vmax.f32 %v62, 1e-24
    %v64 = vrsqrt.pop %v63
    %v65 = vmul.f32 %v59, %v64
    %v66 = vmul.f32 %v65, 2.0
    %v67 = vld [vmem:[#allocation4] sm:$0xf]
    %v68 = vpack.c.bf16 %v66, %v66
    %69 = vmatprep.subr.bf16.mxu0 0
    %70 = vmatpush1.bf16.xpose.msra.mxu0 %v68
    %71 = vmatprep.subr.bf16.mxu0 0
    %72 = vmatpush1.bf16.xpose.msra.mxu0 0
    %73 = vmatprep.subr.bf16.mxu0 0
    %74 = vmatpush1.bf16.xpose.msra.mxu0 0
    %75 = vmatprep.subr.bf16.mxu0 0
    %76 = vmatpush1.bf16.xpose.msra.mxu0 0
    %77 = vmatprep.subr.bf16.mxu0 0
    %78 = vmatpush1.bf16.xpose.msra.mxu0 0
    %79 = vmatprep.subr.bf16.mxu0 0
    %80 = vmatpush1.bf16.xpose.msra.mxu0 0
    %81 = vmatprep.subr.bf16.mxu0 0
    %82 = vmatpush1.bf16.xpose.msra.mxu0 0
    %83 = vmatprep.subr.bf16.mxu0 0
    %84 = vmatpush1.bf16.xpose.msra.mxu0 0
    %85 = vmatprep.subr.bf16.mxu0 0
    %86 = vmatpush1.bf16.xpose.msra.mxu0 0
    %87 = vmatprep.subr.bf16.mxu0 0
    %88 = vmatpush1.bf16.xpose.msra.mxu0 0
    %89 = vmatprep.subr.bf16.mxu0 0
    %90 = vmatpush1.bf16.xpose.msra.mxu0 0
    %91 = vmatprep.subr.bf16.mxu0 0
    %92 = vmatpush1.bf16.xpose.msra.mxu0 0
    %93 = vmatprep.subr.bf16.mxu0 0
    %94 = vmatpush1.bf16.xpose.msra.mxu0 0
    %95 = vmatprep.subr.bf16.mxu0 0
    %96 = vmatpush1.bf16.xpose.msra.mxu0 0
    %97 = vmatprep.subr.bf16.mxu0 0
    %98 = vmatpush1.bf16.xpose.msra.mxu0 0
    %99 = vmatprep.subr.bf16.mxu0 0
    %100 = vmatpush1.bf16.xpose.msra.mxu0 0
    %101 = vmatprep.mubr.bf16.mxu0 0
    %102 = vmatmul.mubr.bf16.gmra.mrb[0].mxu0 %v67
    %v103 = vpop.f32.mrb[0].mxu0
    %v104 = vadd.f32 0.0, %v103
    %v105 = vpop.f32.mrb[0].mxu0
    %v106 = vpop.f32.mrb[0].mxu0
    %v107 = vpop.f32.mrb[0].mxu0
    %108 = vdwg.mxu0
    %v109 = vsub.f32 %v104, 2.0
    %v110 = vmul.f32 %v109, 1.442695
    %v111 = vpow.pop %v110
    %v112 = vld [vmem:[#allocation5] sm:$0xff]
    %vm113 = vcmask 64512
    %v114 = vsel %vm113, %v111, 0.0
    %115 = vadd.xlane.f32.xlu0 %v114
    %v116 = vpop.xlane.xlu0 %115
    %v117 = vadd.f32 %v112, %v116
    %vm118 = vcmask 7168
    %119 = vst.msk [vmem:[#allocation5] sm:$0xff] %vm118, %v117
    %v120 = vld [vmem:[#allocation6] sm:$0x1]
    %v121 = vrot.slane %v114, 4
    %v122 = vadd.f32 %v114, %v121
    %v123 = vrot.slane %v122, 2
    %v124 = vadd.f32 %v122, %v123
    %v125 = vrot.slane %v124, 1
    %v126 = vadd.f32 %v124, %v125
    %v127 = vlog2.pop %v126
    %v128 = vmul.f32 %v127, 0.6931472
    %vm129 = vcmask 57344
    %v130 = vsel %vm129, %v128, 0.0
    %131 = vadd.xlane.f32.xlu0 %v130
    %v132 = vpop.xlane.xlu0 %131
    %v133 = vrot.slane %v132, 4
    %v134 = vadd.f32 %v132, %v133
    %v135 = vrot.slane %v134, 2
    %v136 = vadd.f32 %v134, %v135
    %v137 = vrot.slane %v136, 1
    %v138 = vadd.f32 %v136, %v137
    %s139 = vtos %v138
    %v140 = vstv %s139
    %v141 = vadd.f32 %v120, %v140
    %vm142 = vcmask 0
    %143 = vst.msk [vmem:[#allocation6] sm:$0x1] %vm142, %v141
    %s144 = smul.u32 0, 8
    %s145 = sshra.s32 %s144, 3
    %s146 = sand.u32 %s144, 7
    %s147 = smul.addr %s145, 4
    %s148 = scalar_lea.vmem [#allocation4], %s147
    %v149 = vld [vmem:[%s148] sm:$0xf]
    %v150 = vunpack.c.l.bf16 %v149
    %v151 = vld [vmem:[#allocation7] sm:$0x1]
    %v152 = vmul.f32 %v150, %v66
    %153 = vadd.xlane.f32.xlu0 %v152
    %v154 = vpop.xlane.xlu0 %153
    %v155 = vrot.slane %v154, 4
    %v156 = vadd.f32 %v154, %v155
    %v157 = vrot.slane %v156, 2
    %v158 = vadd.f32 %v156, %v157
    %v159 = vrot.slane %v158, 1
    %v160 = vadd.f32 %v158, %v159
    %s161 = vtos %v160
    %v162 = vstv %s161
    %v163 = vadd.f32 %v151, %v162
    %164 = vst.msk [vmem:[#allocation7] sm:$0x1] %vm142, %v163
    // Predicated region
    $region18: #{tpu_custom_call.1} parent=1 // pred_check
      %p165 = pneg %p27
    $region19: #{tpu_custom_call.1} parent=1 // pred_check_branch
      %167 = sbr.rel (%p165) target = $region21
    $region20: #{tpu_custom_call.1} parent=1 // pred_region
      %v168 = vld [vmem:[#allocation5] sm:$0xff]
      %v169 = vlog2.pop %v168
      %v170 = vmul.f32 %v169, 0.6931472
      %v171 = vsel %vm118, %v170, 0.0
      %172 = vadd.xlane.f32.xlu0 %v171
      %v173 = vpop.xlane.xlu0 %172
      %v174 = vrot.slane %v173, 4
      %v175 = vadd.f32 %v173, %v174
      %v176 = vrot.slane %v175, 2
      %v177 = vadd.f32 %v175, %v176
      %v178 = vrot.slane %v177, 1
      %v179 = vadd.f32 %v177, %v178
      %s180 = vtos %v179
      %s181 = sadd.f32 %s180, 16.0
      %v182 = vld [vmem:[#allocation6] sm:$0x1]
      %v183 = vadd.f32 %v182, 0.0
      %s184 = vtos %v183
      %s185 = sadd.f32 %s184, 16.0
      %s186 = sadd.f32 %s181, %s185
      %v187 = vld [vmem:[#allocation7] sm:$0x1]
      %v188 = vadd.f32 %v187, 0.0
      %s189 = vtos %v188
      %s190 = smul.f32 %s189, 2.0
      %s191 = ssub.f32 %s186, %s190
      %s192 = scalar_lea.smem [#allocation11], 0
      %193 = sst [smem:[%s192]] %s191
    $region21: #{tpu_custom_call.1} parent=1 // pred_fallthru
      _
    // Predicated region
    $region22: #{tpu_custom_call.1} parent=1 // pred_check
      _
    $region23: #{tpu_custom_call.1} parent=1 // pred_check_branch
      %195 = sbr.rel (0) target = $region25
    $region24: #{tpu_custom_call.1} parent=1 // pred_region
      %s197 = ssub.s32 16, 16
      %198 = vsyncadd [#allocation10], %s197
      %201 = dma.smem_to_hbm [#allocation11], 16, %s2, [#allocation10]
    $region25: #{tpu_custom_call.1} parent=1 // pred_fallthru
      _
    // Predicated region
    $region26: #{tpu_custom_call.1} parent=1 // pred_check
      _
    $region27: #{tpu_custom_call.1} parent=1 // pred_check_branch
      %203 = sbr.rel (0) target = $region29
    $region28: #{tpu_custom_call.1} parent=1 // pred_region
      %204 = dma.done [#allocation10], 16
    $region29: #{tpu_custom_call.1} parent=1 // pred_fallthru
      _
    %205 = sfence
    %206 = vsyncpa [#allocation9], 1
    %207 = vsyncpa [#allocation10], 1
  %208 = vsyncmov [#allocation3]
  %s209 = vpop.sfrf %208
  %p210 = scmp.eq.s32.totalorder %s209, 0
  %p211 = pneg %p210
  %213 = shalt.err (%p211)

</llo_original>
